<compile_context>
chip_gen: v7x
topology: tpu7x:2x2x1
jax: 0.10.0
libtpu: 0.0.40
codegen_flags: <defaults>
</compile_context>

<pallas_src>
import functools

import jax
import jax.numpy as jnp
from jax.experimental import pallas as pl
from jax.experimental.pallas import tpu as pltpu


# ----------------------------------------------------------------------------
# Kernels
# ----------------------------------------------------------------------------
def _fusion_kernel_whole(ip_ref, emb_ref, out_ref):
    """Fallback path: one block per sample (small / non-tileable channels).

    ip_ref : (1, C_ip,  HW)
    emb_ref: (1, C_emb, 1)
    out_ref: (1, C_ip + C_emb, HW)
    """
    c_ip = ip_ref.shape[1]
    c_emb = emb_ref.shape[1]
    hw = out_ref.shape[2]

    # Pass-through of the spatial feature map into the leading channels.
    out_ref[:, :c_ip, :] = ip_ref[...]
    # Broadcast (lane splat) of the per-sample embedding, fused with concat.
    out_ref[:, c_ip:, :] = jnp.broadcast_to(emb_ref[...], (1, c_emb, hw))


def _fusion_kernel_ctiled(ip_ref, emb_ref, out_ref, *, nb_ip, nb_total, bc):
    """Flat-grid channel-tiled path: each step is a pure copy or pure splat.

    ip_ref : (1, bc, HW)         current ip channel block (clamped in emb region)
    emb_ref: (1, C_emb_pad, 1)   whole per-sample embedding, resident in VMEM
    out_ref: (1, bc, HW)
    """
    c = pl.program_id(0) % nb_total  # channel-block index within the sample

    @pl.when(c < nb_ip)
    def _copy_ip():
        out_ref[...] = ip_ref[...]

    @pl.when(c >= nb_ip)
    def _splat_emb():
        start = pl.multiple_of((c - nb_ip) * bc, bc)   # bc is a multiple of 8
        blk = emb_ref[:, pl.ds(start, bc), :]          # (1, bc, 1)
        out_ref[...] = jnp.broadcast_to(blk, out_ref.shape)


# ----------------------------------------------------------------------------
# Generation-aware sizing
# ----------------------------------------------------------------------------
def _vmem_limit_bytes():
    """Scoped-VMEM request: 3/4 of physical, capped at 64 MiB (v7x has 64 MiB/TC)."""
    cap = 128 * 1024 * 1024
    try:
        cap = int(pltpu.get_tpu_info().vmem_capacity_bytes)
    except Exception:
        pass
    return max(16 * 1024 * 1024, min(cap * 3 // 4, 64 * 1024 * 1024))


def _pick_channel_tile(c_ip, hw, itemsize, budget):
    """Largest multiple-of-8 divisor of C_ip whose (bc, HW) block fits the
    budget; if even the smallest divisor overshoots, still prefer it over the
    whole-sample fallback. Returns None only when C_ip has no multiple-of-8
    divisor (tiny/odd channel counts)."""
    if c_ip < 8 or c_ip % 8 != 0:
        return None
    divisors = [d for d in range(8, c_ip + 1, 8) if c_ip % d == 0]
    fitting = [d for d in divisors if d * hw * itemsize <= budget]
    if fitting:
        return max(fitting)
    return min(divisors)


# ----------------------------------------------------------------------------
# Wrapper
# ----------------------------------------------------------------------------
def fusion_layer(ip, emb):
    """Pallas implementation of FusionLayer.forward((ip, emb))."""
    n, c_ip, h, w = ip.shape
    n_e, c_emb = emb.shape
    assert n == n_e, "batch dims of ip and emb must match"
    assert ip.dtype == emb.dtype

    hw = h * w
    c_total = c_ip + c_emb
    itemsize = jnp.dtype(ip.dtype).itemsize

    # Lane-dense views: H*W becomes the 128-wide lane axis (free NCHW views).
    ip3 = ip.reshape(n, c_ip, hw)

    vmem_limit = _vmem_limit_bytes()
    # Per-block budget: ~4x block lives in VMEM (in+out, double-buffered).
    budget = 4 * 1024 * 1024 if vmem_limit <= 48 * 1024 * 1024 else 8 * 1024 * 1024
    bc = _pick_channel_tile(c_ip, hw, itemsize, budget)

    out_shape = jax.ShapeDtypeStruct((n, c_total, hw), ip.dtype)
    cost = pl.CostEstimate(
        flops=0,
        transcendentals=0,
        bytes_accessed=itemsize * (n * c_ip * hw + n * c_emb + n * c_total * hw),
    )

    if bc is not None:
        # ----- channel-tiled fast path -------------------------------------
        nb_ip = c_ip // bc                       # bc divides C_ip exactly
        nb_emb = (c_emb + bc - 1) // bc          # ceil-div; ragged tail masked
        nb_total = nb_ip + nb_emb
        c_emb_pad = nb_emb * bc

        emb3 = emb.reshape(n, c_emb, 1)
        if c_emb_pad != c_emb:
            # Padding rows only land in output channels >= C_total, which the
            # partial trailing output block drops on writeback.
            emb3 = jnp.pad(emb3, ((0, 0), (0, c_emb_pad - c_emb), (0, 0)))

        kernel = functools.partial(
            _fusion_kernel_ctiled, nb_ip=nb_ip, nb_total=nb_total, bc=bc)

        # Single flat parallel axis: (sample, channel-block) -> megacore gets
        # an even split of the HBM-bound work even for tiny batch sizes.
        grid = (n * nb_total,)
        in_specs = [
            # Clamp so the ip block index is unchanged through the emb region
            # of each sample (Pallas skips the redundant DMA).
            pl.BlockSpec(
                (1, bc, hw),
                lambda f: (f // nb_total,
                           jnp.minimum(f % nb_total, nb_ip - 1), 0)),
            # Whole per-sample embedding resident in VMEM: index changes only
            # when the sample changes -> exactly N tiny DMAs for the grid.
            pl.BlockSpec((1, c_emb_pad, 1), lambda f: (f // nb_total, 0, 0)),
        ]
        out_specs = pl.BlockSpec(
            (1, bc, hw), lambda f: (f // nb_total, f % nb_total, 0))
        dims = ("parallel",)
        operands = (ip3, emb3)
    else:
        # ----- whole-sample fallback (tiny / unaligned channel counts) -----
        emb3 = emb.reshape(n, c_emb, 1)
        kernel = _fusion_kernel_whole
        grid = (n,)
        in_specs = [
            pl.BlockSpec((1, c_ip, hw), lambda i: (i, 0, 0)),
            pl.BlockSpec((1, c_emb, 1), lambda i: (i, 0, 0)),
        ]
        out_specs = pl.BlockSpec((1, c_total, hw), lambda i: (i, 0, 0))
        dims = ("parallel",)
        operands = (ip3, emb3)

    out3 = pl.pallas_call(
        kernel,
        out_shape=out_shape,
        grid_spec=pltpu.PrefetchScalarGridSpec(
            num_scalar_prefetch=0,
            grid=grid,
            in_specs=in_specs,
            out_specs=out_specs,
        ),
        compiler_params=pltpu.CompilerParams(
            dimension_semantics=dims,
            vmem_limit_bytes=vmem_limit,
        ),
        cost_estimate=cost,
    )(*operands)

    return out3.reshape(n, c_total, h, w)


# ----------------------------------------------------------------------------
# Pure-JAX reference mirroring the PyTorch code
# ----------------------------------------------------------------------------
def _fusion_ref(ip, emb):
    n, c_ip, h, w = ip.shape
    emb_b = jnp.broadcast_to(emb[:, :, None, None], (n, emb.shape[1], h, w))
    return jnp.concatenate([ip, emb_b], axis=1)


if __name__ == "__main__":
    key = jax.random.PRNGKey(0)
    k1, k2, k3, k4, k5, k6 = jax.random.split(key, 6)

    # Test 1: small shapes consistent with the module (whole-sample fallback):
    # batch=2, C_ip=4, H=W=16, C_emb=8.
    ip_a = jax.random.normal(k1, (2, 4, 16, 16), dtype=jnp.float32)
    emb_a = jax.random.normal(k2, (2, 8), dtype=jnp.float32)
    out_a = jax.block_until_ready(fusion_layer(ip_a, emb_a))
    assert out_a.shape == (2, 12, 16, 16), out_a.shape
    assert jnp.array_equal(out_a, _fusion_ref(ip_a, emb_a)), "mismatch (whole)"

    # Test 2: channel-tiled path, single ip block, padded emb tail:
    # batch=2, C_ip=64, H=W=16, C_emb=40 -> bc=64, nb_ip=1, nb_emb=1.
    ip_b = jax.random.normal(k3, (2, 64, 16, 16), dtype=jnp.float32)
    emb_b = jax.random.normal(k4, (2, 40), dtype=jnp.float32)
    out_b = jax.block_until_ready(fusion_layer(ip_b, emb_b))
    assert out_b.shape == (2, 104, 16, 16), out_b.shape
    assert jnp.array_equal(out_b, _fusion_ref(ip_b, emb_b)), "mismatch (tiled)"

    # Test 3: channel-tiled path, multiple emb blocks + ragged trailing block:
    # batch=2, C_ip=16, H=W=8, C_emb=40 -> bc=16, nb_ip=1, nb_emb=3.
    ip_c = jax.random.normal(k5, (2, 16, 8, 8), dtype=jnp.float32)
    emb_c = jax.random.normal(k6, (2, 40), dtype=jnp.float32)
    out_c = jax.block_until_ready(fusion_layer(ip_c, emb_c))
    assert out_c.shape == (2, 56, 8, 8), out_c.shape
    assert jnp.array_equal(out_c, _fusion_ref(ip_c, emb_c)), "mismatch (ragged)"

    print("KERNEL_OK")
</pallas_src>

<mosaic_0001>
module attributes {stable_mosaic.version = 11 : i64} {
  func.func @_fusion_kernel_whole(%arg0: i32, %arg1: memref<1x4x256xf32, #tpu.memory_space<vmem>>, %arg2: memref<1x8x1xf32, #tpu.memory_space<vmem>>, %arg3: memref<1x12x256xf32, #tpu.memory_space<vmem>>) attributes {dimension_semantics = [#tpu.dimension_semantics<parallel>], iteration_bounds = array<i64: 2>, scalar_prefetch = 0 : i64, scratch_operands = 0 : i64, tpu.core_type = #tpu.core_type<tc>, window_params = [{transform_indices = @transform_0, window_bounds = array<i64: 1, 4, 256>}, {transform_indices = @transform_1, window_bounds = array<i64: 1, 8, 1>}, {transform_indices = @transform_2, window_bounds = array<i64: 1, 12, 256>}]} {
    %c0 = arith.constant 0 : index
    %c0_0 = arith.constant 0 : index
    %c0_1 = arith.constant 0 : index
    %0 = vector.load %arg1[%c0, %c0_0, %c0_1] : memref<1x4x256xf32, #tpu.memory_space<vmem>>, vector<1x4x256xf32>
    %c0_2 = arith.constant 0 : index
    %c0_3 = arith.constant 0 : index
    %c0_4 = arith.constant 0 : index
    %1 = vector.load %arg3[%c0_2, %c0_3, %c0_4] : memref<1x12x256xf32, #tpu.memory_space<vmem>>, vector<1x4x256xf32>
    tpu.vector_store %arg3[%c0_2, %c0_3, %c0_4], %0 {strides = array<i32>} : memref<1x12x256xf32, #tpu.memory_space<vmem>>, vector<1x4x256xf32>,
    %c0_5 = arith.constant 0 : index
    %c0_6 = arith.constant 0 : index
    %c0_7 = arith.constant 0 : index
    %2 = vector.load %arg2[%c0_5, %c0_6, %c0_7] : memref<1x8x1xf32, #tpu.memory_space<vmem>>, vector<1x8x1xf32>
    %3 = vector.shape_cast %2 : vector<1x8x1xf32> to vector<1x8x1xf32>
    %4 = vector.broadcast %3 : vector<1x8x1xf32> to vector<1x8x256xf32>
    %c0_8 = arith.constant 0 : index
    %c4 = arith.constant 4 : index
    %c0_9 = arith.constant 0 : index
    %5 = vector.load %arg3[%c0_8, %c4, %c0_9] : memref<1x12x256xf32, #tpu.memory_space<vmem>>, vector<1x8x256xf32>
    tpu.vector_store %arg3[%c0_8, %c4, %c0_9], %4 {strides = array<i32>} : memref<1x12x256xf32, #tpu.memory_space<vmem>>, vector<1x8x256xf32>,
    return
  }
  func.func @transform_0(%arg0: i32) -> (i32, i32, i32) {
    %c0_i32 = arith.constant 0 : i32
    %c0_i32_0 = arith.constant 0 : i32
    %c0_i32_1 = arith.constant 0 : i32
    return %arg0, %c0_i32, %c0_i32_0 : i32, i32, i32
  }
  func.func @transform_1(%arg0: i32) -> (i32, i32, i32) {
    %c0_i32 = arith.constant 0 : i32
    %c0_i32_0 = arith.constant 0 : i32
    %c0_i32_1 = arith.constant 0 : i32
    return %arg0, %c0_i32, %c0_i32_0 : i32, i32, i32
  }
  func.func @transform_2(%arg0: i32) -> (i32, i32, i32) {
    %c0_i32 = arith.constant 0 : i32
    %c0_i32_0 = arith.constant 0 : i32
    %c0_i32_1 = arith.constant 0 : i32
    return %arg0, %c0_i32, %c0_i32_0 : i32, i32, i32
  }
}

</mosaic_0001>

<llo_original>
// kernel: tpu_custom_call.1
$region0: #{tpu_custom_call.1}
  #allocation0 [shape = 'u32[]', space=smem, size = 0x4, offset = 0x4, fixed_abs, tag = 'smem constant byte address 0x4 - core index']
  #allocation1 [shape = 'u32[144,128]{1,0:T(1,128)}', space=vmem, size = 0x12000, scoped, tag = 'internal scratch']
  %s0 = inlined_call_operand.hbm [shape: f32[2,4,256], index: 0, kind: input, shape index: {}]
  %s1 = inlined_call_operand.hbm [shape: f32[2,8,1], index: 1, kind: input, shape index: {}]
  %s2 = inlined_call_operand.hbm [shape: f32[2,12,256], index: 2, kind: output, shape index: {}]
  %s3 = sld [smem:[#allocation0]]
  $region49: #{tpu_custom_call.1} parent=0
    _
  %s5 = ssub.s32 1, %s3
  %s6 = scalar_select 0, %s5, %s3
  $region1: #{tpu_custom_call.1} parent=0
    #allocation2 [shape = 'u8[8192]{0}', space=vmem, size = 0x2000, scoped, tag = 'input window, operand 0']
    #allocation3 [shape = 's32[2]{0}', space=sflag, size = 0x8, scoped, tag = 'scoped memory for tpu_custom_call.1']
    #allocation4 [shape = 's32[2]{0}', space=sflag, size = 0x8, scoped, tag = 'scoped memory for tpu_custom_call.1']
    #allocation5 [shape = 'u8[8192]{0}', space=vmem, size = 0x2000, scoped, tag = 'input window, operand 1']
    #allocation6 [shape = 's32[2]{0}', space=sflag, size = 0x8, scoped, tag = 'scoped memory for tpu_custom_call.1']
    #allocation7 [shape = 'u8[32768]{0}', space=vmem, size = 0x8000, scoped, tag = 'output window, operand 0']
    %7 = vsyncpa [#allocation3], 0
    %s8 = scalar_lea.sflag [#allocation3], 1
    %9 = vsyncpa %s8, 0
    %10 = vsyncpa [#allocation6], 0
    %s11 = scalar_lea.sflag [#allocation6], 1
    %12 = vsyncpa %s11, 0
    %13 = vsyncpa [#allocation4], 0
    %s14 = scalar_lea.sflag [#allocation4], 1
    %15 = vsyncpa %s14, 0
    loop: start=0, step=1, limit=4
    $region2: #{tpu_custom_call.1} parent=1 // loop_pre_header
      _
    $region3: #{tpu_custom_call.1} parent=1 // loop_header
      %s17 = sphi 0, %s21
      %p18 = scmp.ge.s32.totalorder %s17, 4
      %s27 = sphi 0, %s29
      %s30 = sphi 0, %s27
      %s31 = sphi 0, %s30
      %s47 = sphi 0, %s31
      %s53 = sphi 0, %s55
      %s56 = sphi 0, %s53
      %s57 = sphi 0, %s56
      %s73 = sphi 0, %s57
      %s79 = sphi 0, %s81
      %s82 = sphi 0, %s79
      %s83 = sphi 0, %s82
      %s99 = sphi 0, %s83
    $region4: #{tpu_custom_call.1} parent=1 // loop_header_branch
      %20 = sbr.rel (%p18) target = $region8
    $region5: #{tpu_custom_call.1} parent=1 // loop_body
      %s22 = ssub.s32 %s17, 1
      %s23 = ssub.s32 %s17, 2
      %s24 = sadd.s32 %s17, 1
      %s25 = ssub.s32 %s17, %s24
      %p26 = scmp.eq.s32.totalorder %s25, 0
      %s28 = sadd.s32 %s27, 1
      %s29 = scalar_select %p26, %s27, %s28
      %p32 = pneg %p26
      %p33 = scmp.eq.s32.totalorder %s17, 1
      %p34 = por %p32, %p33
      %p35 = scmp.ne.s32.totalorder %s27, %s30
      %p36 = scmp.eq.s32.totalorder %s17, 0
      %p37 = por %p35, %p36
      %p38 = scmp.ne.s32.totalorder %s27, %s30
      %p39 = scmp.eq.s32.totalorder %s22, 1
      %p40 = por %p38, %p39
      %p41 = scmp.ne.s32.totalorder %s30, %s31
      %p42 = scmp.eq.s32.totalorder %s22, 0
      %p43 = por %p41, %p42
      %p44 = scmp.ne.s32.totalorder %s30, %s31
      %p45 = scmp.eq.s32.totalorder %s23, 1
      %p46 = por %p44, %p45
      %p48 = scmp.ne.s32.totalorder %s31, %s47
      %p49 = scmp.eq.s32.totalorder %s23, 0
      %p50 = por %p48, %p49
      %s51 = ssub.s32 %s17, %s24
      %p52 = scmp.eq.s32.totalorder %s51, 0
      %s54 = sadd.s32 %s53, 1
      %s55 = scalar_select %p52, %s53, %s54
      %p58 = pneg %p52
      %p59 = scmp.eq.s32.totalorder %s17, 1
      %p60 = por %p58, %p59
      %p61 = scmp.ne.s32.totalorder %s53, %s56
      %p62 = scmp.eq.s32.totalorder %s17, 0
      %p63 = por %p61, %p62
      %p64 = scmp.ne.s32.totalorder %s53, %s56
      %p65 = scmp.eq.s32.totalorder %s22, 1
      %p66 = por %p64, %p65
      %p67 = scmp.ne.s32.totalorder %s56, %s57
      %p68 = scmp.eq.s32.totalorder %s22, 0
      %p69 = por %p67, %p68
      %p70 = scmp.ne.s32.totalorder %s56, %s57
      %p71 = scmp.eq.s32.totalorder %s23, 1
      %p72 = por %p70, %p71
      %p74 = scmp.ne.s32.totalorder %s57, %s73
      %p75 = scmp.eq.s32.totalorder %s23, 0
      %p76 = por %p74, %p75
      %s77 = ssub.s32 %s17, %s24
      %p78 = scmp.eq.s32.totalorder %s77, 0
      %s80 = sadd.s32 %s79, 1
      %s81 = scalar_select %p78, %s79, %s80
      %p84 = pneg %p78
      %p85 = scmp.eq.s32.totalorder %s17, 1
      %p86 = por %p84, %p85
      %p87 = scmp.ne.s32.totalorder %s79, %s82
      %p88 = scmp.eq.s32.totalorder %s17, 0
      %p89 = por %p87, %p88
      %p90 = scmp.ne.s32.totalorder %s79, %s82
      %p91 = scmp.eq.s32.totalorder %s22, 1
      %p92 = por %p90, %p91
      %p93 = scmp.ne.s32.totalorder %s82, %s83
      %p94 = scmp.eq.s32.totalorder %s22, 0
      %p95 = por %p93, %p94
      %p96 = scmp.ne.s32.totalorder %s82, %s83
      %p97 = scmp.eq.s32.totalorder %s23, 1
      %p98 = por %p96, %p97
      %p100 = scmp.ne.s32.totalorder %s83, %s99
      %p101 = scmp.eq.s32.totalorder %s23, 0
      %p102 = por %p100, %p101
      %p103 = scmp.le.s32.totalorder 1, %s17
      %p104 = scmp.lt.s32.totalorder %s17, 3
      %p105 = pnand %p103, %p104
      %p106 = pneg %p105
      // Predicated region
      $region9: #{tpu_custom_call.1} parent=5 // pred_check
        _
      $region10: #{tpu_custom_call.1} parent=5 // pred_check_branch
        %108 = sbr.rel (%p105) target = $region12
      $region11: #{tpu_custom_call.1} parent=5 // pred_region
        %s109 = ssub.s32 %s17, 1
      $region12: #{tpu_custom_call.1} parent=5 // pred_fallthru
        _
      %p110 = scmp.lt.s32.totalorder %s17, 2
      // Predicated region
      $region13: #{tpu_custom_call.1} parent=5 // pred_check
        %p111 = pneg %p110
      $region14: #{tpu_custom_call.1} parent=5 // pred_check_branch
        %113 = sbr.rel (%p111) target = $region16
      $region15: #{tpu_custom_call.1} parent=5 // pred_region
        // Predicated region
        $region17: #{tpu_custom_call.1} parent=15 // pred_check
          %p114 = pneg %p37
        $region18: #{tpu_custom_call.1} parent=15 // pred_check_branch
          %116 = sbr.rel (%p114) target = $region20
        $region19: #{tpu_custom_call.1} parent=15 // pred_region
          %s117 = sand.u32 %s27, 1
          %s118 = scalar_lea.sflag [#allocation3], %s117
          %s119 = sand.u32 %s27, 1
          %s120 = smul.addr %s119, 8
          %s121 = scalar_lea.vmem [#allocation2], %s120
          %s123 = ssub.s32 128, 128
          %124 = vsyncadd %s118, %s123
          %s125 = smul.addr %s17, 2
          %s126 = smul.addr %s125, 64
          %s127 = scalar_lea.hbm %s0, %s126
          %s129 = sshll.u32 %s121, 4
          %s130 = int_to_ptr.vmem [resolvable:$true] %s129
          %132 = dma.hbm_to_vmem [thread:$0]  %s127, 128, %s130, %s118
        $region20: #{tpu_custom_call.1} parent=15 // pred_fallthru
          _
        // Predicated region
        $region21: #{tpu_custom_call.1} parent=15 // pred_check
          %p133 = pneg %p63
        $region22: #{tpu_custom_call.1} parent=15 // pred_check_branch
          %135 = sbr.rel (%p133) target = $region24
        $region23: #{tpu_custom_call.1} parent=15 // pred_region
          %s136 = sand.u32 %s53, 1
          %s137 = scalar_lea.sflag [#allocation6], %s136
          %s138 = sand.u32 %s53, 1
          %s139 = smul.addr %s138, 8
          %s140 = scalar_lea.vmem [#allocation5], %s139
          %s142 = ssub.s32 128, 128
          %143 = vsyncadd %s137, %s142
          %s144 = smul.addr %s17, 128
          %s145 = scalar_lea.hbm %s1, %s144
          %s147 = sshll.u32 %s140, 4
          %s148 = int_to_ptr.vmem [resolvable:$true] %s147
          %150 = dma.hbm_to_vmem [thread:$0]  %s145, 128, %s148, %s137
        $region24: #{tpu_custom_call.1} parent=15 // pred_fallthru
          _
      $region16: #{tpu_custom_call.1} parent=5 // pred_fallthru
        _
      %p151 = scmp.le.s32.totalorder 1, %s17
      %p152 = scmp.lt.s32.totalorder %s17, 3
      %p153 = pnand %p151, %p152
      %p154 = pneg %p153
      // Predicated region
      $region25: #{tpu_custom_call.1} parent=5 // pred_check
        _
      $region26: #{tpu_custom_call.1} parent=5 // pred_check_branch
        %156 = sbr.rel (%p153) target = $region28
      $region27: #{tpu_custom_call.1} parent=5 // pred_region
        %s157 = ssub.s32 %s17, 1
        %s158 = sand.u32 %s30, 1
        %s159 = scalar_lea.sflag [#allocation3], %s158
        %s160 = sand.u32 %s30, 1
        %s161 = smul.addr %s160, 8
        %s162 = scalar_lea.vmem [#allocation2], %s161
        // Predicated region
        $region29: #{tpu_custom_call.1} parent=27 // pred_check
          %p163 = pneg %p43
        $region30: #{tpu_custom_call.1} parent=27 // pred_check_branch
          %165 = sbr.rel (%p163) target = $region32
        $region31: #{tpu_custom_call.1} parent=27 // pred_region
          %166 = dma.done %s159, 128
        $region32: #{tpu_custom_call.1} parent=27 // pred_fallthru
          _
        %s167 = sand.u32 %s56, 1
        %s168 = scalar_lea.sflag [#allocation6], %s167
        %s169 = sand.u32 %s56, 1
        %s170 = smul.addr %s169, 8
        %s171 = scalar_lea.vmem [#allocation5], %s170
        // Predicated region
        $region33: #{tpu_custom_call.1} parent=27 // pred_check
          %p172 = pneg %p69
        $region34: #{tpu_custom_call.1} parent=27 // pred_check_branch
          %174 = sbr.rel (%p172) target = $region36
        $region35: #{tpu_custom_call.1} parent=27 // pred_region
          %175 = dma.done %s168, 128
        $region36: #{tpu_custom_call.1} parent=27 // pred_fallthru
          _
        %s176 = sand.u32 %s30, 1
        %s177 = scalar_lea.sflag [#allocation3], %s176
        %s178 = sand.u32 %s30, 1
        %s179 = smul.addr %s178, 8
        %s180 = scalar_lea.vmem [#allocation2], %s179
        %p181 = pneg %p43
        %p182 = pneg %p40
        %s183 = sand.u32 %s56, 1
        %s184 = scalar_lea.sflag [#allocation6], %s183
        %s185 = sand.u32 %s56, 1
        %s186 = smul.addr %s185, 8
        %s187 = scalar_lea.vmem [#allocation5], %s186
        %p188 = pneg %p69
        %p189 = pneg %p66
        %p190 = pneg %p95
        %p191 = pneg %p92
        %s192 = sand.u32 %s82, 1
        %s193 = scalar_lea.sflag [#allocation4], %s192
        %s194 = sand.u32 %s82, 1
        %s195 = smul.addr %s194, 32
        %s196 = scalar_lea.vmem [#allocation7], %s195
        %v197 = vld [vmem:[%s162] sm:$0xff]
        %v199 = vcombine.high %v197, %v197
        %201 = vst [vmem:[%s196] sm:$0xf] %v197
        %202 = vst [vmem:[%s196 + $0x8] sm:$0xf] %v199
        %v203 = vld [vmem:[%s171] sm:$0xff]
        %205 = vset.pattern.permute.xlu0 0
        %206 = vperm.xlu0 %205, %v203
        %v207 = vpop.permute.xlu0 %206
        %v208 = vrot.slane %v207, 4
        %210 = vst [vmem:[%s196] sm:$0xf0] %v208
        %211 = vst [vmem:[%s196 + $0x8] sm:$0xf0] %v208
        %212 = vst [vmem:[%s196 + $0x10] sm:$0xf] %v208
        %213 = vst [vmem:[%s196 + $0x18] sm:$0xf] %v208
        %s214 = sand.u32 %s82, 1
        %s215 = scalar_lea.sflag [#allocation4], %s214
        %s216 = sand.u32 %s82, 1
        %s217 = smul.addr %s216, 32
        %s218 = scalar_lea.vmem [#allocation7], %s217
        // Predicated region
        $region37: #{tpu_custom_call.1} parent=27 // pred_check
          %p219 = pneg %p92
        $region38: #{tpu_custom_call.1} parent=27 // pred_check_branch
          %221 = sbr.rel (%p219) target = $region40
        $region39: #{tpu_custom_call.1} parent=27 // pred_region
          %s223 = ssub.s32 512, 512
          %224 = vsyncadd %s215, %s223
          %s225 = smul.addr %s22, 4
          %s226 = smul.addr %s225, 128
          %s227 = scalar_lea.hbm %s2, %s226
          %s228 = sshll.u32 %s218, 4
          %s229 = int_to_ptr.vmem [resolvable:$true] %s228
          %234 = dma.vmem_to_hbm [thread:$0]  %s229, 512, %s227, %s215, 256, 256, 16
        $region40: #{tpu_custom_call.1} parent=27 // pred_fallthru
          _
      $region28: #{tpu_custom_call.1} parent=5 // pred_fallthru
        _
      %p235 = scmp.le.s32.totalorder 2, %s17
      // Predicated region
      $region41: #{tpu_custom_call.1} parent=5 // pred_check
        %p236 = pneg %p235
      $region42: #{tpu_custom_call.1} parent=5 // pred_check_branch
        %238 = sbr.rel (%p236) target = $region44
      $region43: #{tpu_custom_call.1} parent=5 // pred_region
        %s239 = ssub.s32 %s17, 2
        // Predicated region
        $region45: #{tpu_custom_call.1} parent=43 // pred_check
          %p240 = pneg %p98
        $region46: #{tpu_custom_call.1} parent=43 // pred_check_branch
          %242 = sbr.rel (%p240) target = $region48
        $region47: #{tpu_custom_call.1} parent=43 // pred_region
          %s243 = sand.u32 %s83, 1
          %s244 = scalar_lea.sflag [#allocation4], %s243
          %s245 = sand.u32 %s83, 1
          %s246 = smul.addr %s245, 32
          %s247 = scalar_lea.vmem [#allocation7], %s246
          %248 = dma.done %s244, 512
        $region48: #{tpu_custom_call.1} parent=43 // pred_fallthru
          _
      $region44: #{tpu_custom_call.1} parent=5 // pred_fallthru
        _
    $region6: #{tpu_custom_call.1} parent=1 // loop_footer
      %s21 = sadd.s32 1, %s17
    $region7: #{tpu_custom_call.1} parent=1 // loop_footer_branch
      %16 = sbr.rel target = $region3
    $region8: #{tpu_custom_call.1} parent=1 // loop_exit
      _
    %249 = vsyncpa [#allocation3], 1
    %s250 = scalar_lea.sflag [#allocation3], 1
    %251 = vsyncpa %s250, 1
    %252 = vsyncpa [#allocation6], 1
    %s253 = scalar_lea.sflag [#allocation6], 1
    %254 = vsyncpa %s253, 1
    %255 = vsyncpa [#allocation4], 1
    %s256 = scalar_lea.sflag [#allocation4], 1
    %257 = vsyncpa %s256, 1

</llo_original>
